<compile_context>
chip_gen: v7x
topology: tpu7x:2x2x1
jax: 0.10.0
libtpu: 0.0.40
codegen_flags: <defaults>
</compile_context>

<pallas_src>
import jax
import jax.numpy as jnp
from jax.experimental import pallas as pl
from jax.experimental.pallas import tpu as pltpu

IN_DIM = 8
LATENT_DIM = 3
PACK = 16                        # rows packed per 128-lane row (16 * 8 = 128)
PACKED_IN = PACK * IN_DIM        # 128
PACKED_LAT = PACK * LATENT_DIM   # 48


def autoencoder_kernel(x_ref, w1_ref, b1_ref, w2_ref, b2_ref,
                       enc_ref, dec_ref):
    # Lane-packed tiles: x (tm, 128), enc (tm, 48), dec (tm, 128).
    x = x_ref[...].astype(jnp.float32)

    # Encoder: (tm,128) @ (128,48) + (1,48), then sigmoid (EUP exp/recip).
    h = jnp.dot(x, w1_ref[...].astype(jnp.float32),
                preferred_element_type=jnp.float32) + b1_ref[...].astype(jnp.float32)
    enc = jax.nn.sigmoid(h)
    enc_ref[...] = enc.astype(enc_ref.dtype)

    # Decoder: (tm,48) @ (48,128) + (1,128).
    dec = jnp.dot(enc, w2_ref[...].astype(jnp.float32),
                  preferred_element_type=jnp.float32) + b2_ref[...].astype(jnp.float32)
    dec_ref[...] = dec.astype(dec_ref.dtype)


def autoencoder_forward(x, w1, b1, w2, b2, *, tile_m=65536):
    """x: [N, 8]; w1: PyTorch-layout (3, 8); b1: (3,); w2: (8, 3); b2: (8,).

    Returns (encoded [N, 3], decoded [N, 8]) matching AutoencoderNet.forward.
    """
    n = x.shape[0]
    out_dtype = x.dtype

    # Pad only up to the next multiple of PACK=16 (needed for the free
    # row-major (N,8)->(N/16,128) packing reshape).  Tile-level raggedness is
    # handled by Pallas partial blocks, so no further padding / slicing.
    n16 = ((n + PACK - 1) // PACK) * PACK
    if n16 != n:
        x = jnp.pad(x, ((0, n16 - n), (0, 0)))
    n_packed = n16 // PACK
    x_packed = x.reshape(n_packed, PACKED_IN)          # zero-copy reshape

    # Block-diagonal packed weights (16 copies of W^T on the diagonal) and
    # tiled biases.  Tiny (128x48 / 48x128), built once per call.
    eye = jnp.eye(PACK, dtype=jnp.float32)
    w1_big = jnp.kron(eye, w1.T.astype(jnp.float32))   # (128, 48)
    w2_big = jnp.kron(eye, w2.T.astype(jnp.float32))   # (48, 128)
    b1_big = jnp.tile(b1.astype(jnp.float32), PACK).reshape(1, PACKED_LAT)
    b2_big = jnp.tile(b2.astype(jnp.float32), PACK).reshape(1, PACKED_IN)

    # Packed-row tile: multiple of 8 sublanes.  Default 4096 packed rows
    # (= 65536 original rows): ~9.5 MiB double-buffered in flight -> fits the
    # v5e 16 MiB scoped-VMEM default, well under v6e/v7x limits, and keeps
    # the grid >= 2 steps for megacore once N is large.
    tm = max(8, (min(tile_m, 65536) // PACK // 8) * 8)
    if n_packed <= tm:
        tm = n_packed                                  # single full block
    grid = (pl.cdiv(n_packed, tm),)

    # Bandwidth-dominated hint for XLA's scheduler.
    weight_bytes = 4 * (PACKED_IN * PACKED_LAT + PACKED_LAT
                        + PACKED_LAT * PACKED_IN + PACKED_IN)
    io_bytes = n16 * (IN_DIM + LATENT_DIM + IN_DIM) * x.dtype.itemsize
    cost = pl.CostEstimate(
        flops=2 * n16 * (IN_DIM * LATENT_DIM + LATENT_DIM * IN_DIM),
        transcendentals=LATENT_DIM * n16,
        bytes_accessed=io_bytes + weight_bytes,
    )

    enc_p, dec_p = pl.pallas_call(
        autoencoder_kernel,
        out_shape=(
            jax.ShapeDtypeStruct((n_packed, PACKED_LAT), out_dtype),
            jax.ShapeDtypeStruct((n_packed, PACKED_IN), out_dtype),
        ),
        grid=grid,
        in_specs=[
            pl.BlockSpec((tm, PACKED_IN), lambda i: (i, 0)),          # x (lane-dense)
            pl.BlockSpec((PACKED_IN, PACKED_LAT), lambda i: (0, 0)),  # W1 blkdiag (resident)
            pl.BlockSpec((1, PACKED_LAT), lambda i: (0, 0)),          # b1
            pl.BlockSpec((PACKED_LAT, PACKED_IN), lambda i: (0, 0)),  # W2 blkdiag (resident)
            pl.BlockSpec((1, PACKED_IN), lambda i: (0, 0)),           # b2
        ],
        out_specs=(
            pl.BlockSpec((tm, PACKED_LAT), lambda i: (i, 0)),
            pl.BlockSpec((tm, PACKED_IN), lambda i: (i, 0)),
        ),
        compiler_params=pltpu.CompilerParams(
            dimension_semantics=("parallel",),   # shard batch across TCs (v7x)
        ),
        cost_estimate=cost,
    )(x_packed, w1_big, b1_big, w2_big, b2_big)

    # Free un-packing reshapes back to the PyTorch output layout.
    enc = enc_p.reshape(n16, LATENT_DIM)
    dec = dec_p.reshape(n16, IN_DIM)
    if n16 != n:
        enc = enc[:n]
        dec = dec[:n]
    return enc, dec


def init_params(key):
    """PyTorch Linear default init: U(-1/sqrt(fan_in), 1/sqrt(fan_in))."""
    k1, k2, k3, k4 = jax.random.split(key, 4)
    bound1 = 1.0 / jnp.sqrt(jnp.float32(IN_DIM))
    bound2 = 1.0 / jnp.sqrt(jnp.float32(LATENT_DIM))
    w1 = jax.random.uniform(k1, (LATENT_DIM, IN_DIM), jnp.float32, -bound1, bound1)
    b1 = jax.random.uniform(k2, (LATENT_DIM,), jnp.float32, -bound1, bound1)
    w2 = jax.random.uniform(k3, (IN_DIM, LATENT_DIM), jnp.float32, -bound2, bound2)
    b2 = jax.random.uniform(k4, (IN_DIM,), jnp.float32, -bound2, bound2)
    return w1, b1, w2, b2


if __name__ == "__main__":
    key = jax.random.PRNGKey(0)
    k_x, k_p = jax.random.split(key)

    batch = 2
    x = jax.random.normal(k_x, (batch, IN_DIM), jnp.float32)
    w1, b1, w2, b2 = init_params(k_p)

    enc, dec = autoencoder_forward(x, w1, b1, w2, b2)
    jax.block_until_ready((enc, dec))

    # Pure-JAX reference check.
    enc_ref = jax.nn.sigmoid(x @ w1.T + b1)
    dec_ref = enc_ref @ w2.T + b2
    assert enc.shape == (batch, LATENT_DIM) and dec.shape == (batch, IN_DIM)
    assert jnp.allclose(enc, enc_ref, atol=1e-5, rtol=1e-5)
    assert jnp.allclose(dec, dec_ref, atol=1e-5, rtol=1e-5)

    # Larger batch: non-multiple of 16 and of the tile -> exercises the PACK
    # pad path, multi-step grid, and the Pallas ragged last block.
    x_big = jax.random.normal(k_x, (5000, IN_DIM), jnp.float32)
    enc_b, dec_b = autoencoder_forward(x_big, w1, b1, w2, b2, tile_m=2048)
    jax.block_until_ready((enc_b, dec_b))
    enc_b_ref = jax.nn.sigmoid(x_big @ w1.T + b1)
    dec_b_ref = enc_b_ref @ w2.T + b2
    assert jnp.allclose(enc_b, enc_b_ref, atol=1e-5, rtol=1e-5)
    assert jnp.allclose(dec_b, dec_b_ref, atol=1e-5, rtol=1e-5)

    print("KERNEL_OK")
</pallas_src>

<mosaic_0001>
module attributes {stable_mosaic.version = 11 : i64} {
  func.func @autoencoder_kernel(%arg0: i32, %arg1: memref<1x128xf32, #tpu.memory_space<vmem>>, %arg2: memref<128x48xf32, #tpu.memory_space<vmem>>, %arg3: memref<1x48xf32, #tpu.memory_space<vmem>>, %arg4: memref<48x128xf32, #tpu.memory_space<vmem>>, %arg5: memref<1x128xf32, #tpu.memory_space<vmem>>, %arg6: memref<1x48xf32, #tpu.memory_space<vmem>>, %arg7: memref<1x128xf32, #tpu.memory_space<vmem>>) attributes {dimension_semantics = [#tpu.dimension_semantics<parallel>], iteration_bounds = array<i64: 1>, scalar_prefetch = 0 : i64, scratch_operands = 0 : i64, tpu.core_type = #tpu.core_type<tc>, window_params = [{transform_indices = @transform_0, window_bounds = array<i64: 1, 128>}, {pipeline_mode = #tpu.pipeline_mode<synchronous>, transform_indices = @transform_1, window_bounds = array<i64: 128, 48>}, {pipeline_mode = #tpu.pipeline_mode<synchronous>, transform_indices = @transform_2, window_bounds = array<i64: 1, 48>}, {pipeline_mode = #tpu.pipeline_mode<synchronous>, transform_indices = @transform_3, window_bounds = array<i64: 48, 128>}, {pipeline_mode = #tpu.pipeline_mode<synchronous>, transform_indices = @transform_4, window_bounds = array<i64: 1, 128>}, {transform_indices = @transform_5, window_bounds = array<i64: 1, 48>}, {transform_indices = @transform_6, window_bounds = array<i64: 1, 128>}]} {
    %c0 = arith.constant 0 : index
    %c0_0 = arith.constant 0 : index
    %0 = vector.load %arg1[%c0, %c0_0] : memref<1x128xf32, #tpu.memory_space<vmem>>, vector<1x128xf32>
    %c0_1 = arith.constant 0 : index
    %c0_2 = arith.constant 0 : index
    %1 = vector.load %arg2[%c0_1, %c0_2] : memref<128x48xf32, #tpu.memory_space<vmem>>, vector<128x48xf32>
    %cst = arith.constant dense<0.000000e+00> : vector<1x48xf32>
    %2 = tpu.matmul %0, %1, %cst {dimension_numbers = #tpu.dot_dimension_numbers<[1], [0], [0], [1], [0, 0, 1, 1], [], []>} : vector<1x128xf32>, vector<128x48xf32>, vector<1x48xf32> -> vector<1x48xf32>
    %c0_3 = arith.constant 0 : index
    %c0_4 = arith.constant 0 : index
    %3 = vector.load %arg3[%c0_3, %c0_4] : memref<1x48xf32, #tpu.memory_space<vmem>>, vector<1x48xf32>
    %4 = arith.addf %2, %3 : vector<1x48xf32>
    %5 = arith.negf %4 : vector<1x48xf32>
    %6 = math.exp %5 : vector<1x48xf32>
    %cst_5 = arith.constant 1.000000e+00 : f32
    %7 = vector.broadcast %cst_5 : f32 to vector<1x48xf32>
    %8 = arith.addf %7, %6 : vector<1x48xf32>
    %9 = arith.divf %7, %8 : vector<1x48xf32>
    %c0_6 = arith.constant 0 : index
    %c0_7 = arith.constant 0 : index
    %10 = vector.load %arg6[%c0_6, %c0_7] : memref<1x48xf32, #tpu.memory_space<vmem>>, vector<1x48xf32>
    tpu.vector_store %arg6[%c0_6, %c0_7], %9 {strides = array<i32>} : memref<1x48xf32, #tpu.memory_space<vmem>>, vector<1x48xf32>,
    %c0_8 = arith.constant 0 : index
    %c0_9 = arith.constant 0 : index
    %11 = vector.load %arg4[%c0_8, %c0_9] : memref<48x128xf32, #tpu.memory_space<vmem>>, vector<48x128xf32>
    %cst_10 = arith.constant dense<0.000000e+00> : vector<1x128xf32>
    %12 = tpu.matmul %9, %11, %cst_10 {dimension_numbers = #tpu.dot_dimension_numbers<[1], [0], [0], [1], [0, 0, 1, 1], [], []>} : vector<1x48xf32>, vector<48x128xf32>, vector<1x128xf32> -> vector<1x128xf32>
    %c0_11 = arith.constant 0 : index
    %c0_12 = arith.constant 0 : index
    %13 = vector.load %arg5[%c0_11, %c0_12] : memref<1x128xf32, #tpu.memory_space<vmem>>, vector<1x128xf32>
    %14 = arith.addf %12, %13 : vector<1x128xf32>
    %c0_13 = arith.constant 0 : index
    %c0_14 = arith.constant 0 : index
    %15 = vector.load %arg7[%c0_13, %c0_14] : memref<1x128xf32, #tpu.memory_space<vmem>>, vector<1x128xf32>
    tpu.vector_store %arg7[%c0_13, %c0_14], %14 {strides = array<i32>} : memref<1x128xf32, #tpu.memory_space<vmem>>, vector<1x128xf32>,
    return
  }
  func.func @transform_0(%arg0: i32) -> (i32, i32) {
    %c0_i32 = arith.constant 0 : i32
    %c0_i32_0 = arith.constant 0 : i32
    return %arg0, %c0_i32 : i32, i32
  }
  func.func @transform_1(%arg0: i32) -> (i32, i32) {
    %c0_i32 = arith.constant 0 : i32
    %c0_i32_0 = arith.constant 0 : i32
    %c0_i32_1 = arith.constant 0 : i32
    return %c0_i32, %c0_i32_0 : i32, i32
  }
  func.func @transform_2(%arg0: i32) -> (i32, i32) {
    %c0_i32 = arith.constant 0 : i32
    %c0_i32_0 = arith.constant 0 : i32
    %c0_i32_1 = arith.constant 0 : i32
    return %c0_i32, %c0_i32_0 : i32, i32
  }
  func.func @transform_3(%arg0: i32) -> (i32, i32) {
    %c0_i32 = arith.constant 0 : i32
    %c0_i32_0 = arith.constant 0 : i32
    %c0_i32_1 = arith.constant 0 : i32
    return %c0_i32, %c0_i32_0 : i32, i32
  }
  func.func @transform_4(%arg0: i32) -> (i32, i32) {
    %c0_i32 = arith.constant 0 : i32
    %c0_i32_0 = arith.constant 0 : i32
    %c0_i32_1 = arith.constant 0 : i32
    return %c0_i32, %c0_i32_0 : i32, i32
  }
  func.func @transform_5(%arg0: i32) -> (i32, i32) {
    %c0_i32 = arith.constant 0 : i32
    %c0_i32_0 = arith.constant 0 : i32
    return %arg0, %c0_i32 : i32, i32
  }
  func.func @transform_6(%arg0: i32) -> (i32, i32) {
    %c0_i32 = arith.constant 0 : i32
    %c0_i32_0 = arith.constant 0 : i32
    return %arg0, %c0_i32 : i32, i32
  }
}

</mosaic_0001>

<llo_original>
// kernel: tpu_custom_call.1
$region0: #{tpu_custom_call.1}
  #allocation0 [shape = 'u32[]', space=smem, size = 0x4, offset = 0x4, fixed_abs, tag = 'smem constant byte address 0x4 - core index']
  #allocation1 [shape = 'u32[144,128]{1,0:T(1,128)}', space=vmem, size = 0x12000, scoped, tag = 'internal scratch']
  %s0 = inlined_call_operand.vmem [shape: f32[1,128], index: 0, kind: input, shape index: {}]
  %s1 = inlined_call_operand.vmem [shape: f32[128,48], index: 1, kind: input, shape index: {}]
  %s2 = inlined_call_operand.vmem [shape: f32[1,48], index: 2, kind: input, shape index: {}]
  %s3 = inlined_call_operand.vmem [shape: f32[48,128], index: 3, kind: input, shape index: {}]
  %s4 = inlined_call_operand.vmem [shape: f32[1,128], index: 4, kind: input, shape index: {}]
  %s5 = inlined_call_operand.hbm [shape: f32[1,48], index: 5, kind: output, shape index: {0}]
  %s6 = inlined_call_operand.hbm [shape: f32[1,128], index: 6, kind: output, shape index: {1}]
  %7 = xla_tuple %s5, %s6
  %s8 = sld [smem:[#allocation0]]
  $region38: #{tpu_custom_call.1} parent=0
    _
  %s10 = ssub.s32 1, %s8
  %s11 = scalar_select 0, %s10, %s8
  $region1: #{tpu_custom_call.1} parent=0
    #allocation2 [shape = 'u8[512]{0}', space=vmem, size = 0x400, scoped, tag = 'output window, operand 0, single buffered']
    #allocation3 [shape = 's32[1]{0}', space=sflag, size = 0x4, scoped, tag = 'scoped memory for tpu_custom_call.1']
    #allocation4 [shape = 'u8[512]{0}', space=vmem, size = 0x400, scoped, tag = 'output window, operand 1, single buffered']
    #allocation5 [shape = 's32[1]{0}', space=sflag, size = 0x4, scoped, tag = 'scoped memory for tpu_custom_call.1']
    %12 = vsyncpa [#allocation3], 0
    %13 = vsyncpa [#allocation5], 0
    // Predicated region
    $region2: #{tpu_custom_call.1} parent=1 // pred_check
      _
    $region3: #{tpu_custom_call.1} parent=1 // pred_check_branch
      %15 = sbr.rel (0) target = $region5
    $region4: #{tpu_custom_call.1} parent=1 // pred_region
      _
    $region5: #{tpu_custom_call.1} parent=1 // pred_fallthru
      _
    // Predicated region
    $region6: #{tpu_custom_call.1} parent=1 // pred_check
      _
    $region7: #{tpu_custom_call.1} parent=1 // pred_check_branch
      %17 = sbr.rel (0) target = $region9
    $region8: #{tpu_custom_call.1} parent=1 // pred_region
      _
    $region9: #{tpu_custom_call.1} parent=1 // pred_fallthru
      _
    // Predicated region
    $region10: #{tpu_custom_call.1} parent=1 // pred_check
      _
    $region11: #{tpu_custom_call.1} parent=1 // pred_check_branch
      %19 = sbr.rel (0) target = $region13
    $region12: #{tpu_custom_call.1} parent=1 // pred_region
      _
    $region13: #{tpu_custom_call.1} parent=1 // pred_fallthru
      _
    // Predicated region
    $region14: #{tpu_custom_call.1} parent=1 // pred_check
      _
    $region15: #{tpu_custom_call.1} parent=1 // pred_check_branch
      %21 = sbr.rel (0) target = $region17
    $region16: #{tpu_custom_call.1} parent=1 // pred_region
      _
    $region17: #{tpu_custom_call.1} parent=1 // pred_fallthru
      _
    // Predicated region
    $region18: #{tpu_custom_call.1} parent=1 // pred_check
      _
    $region19: #{tpu_custom_call.1} parent=1 // pred_check_branch
      %23 = sbr.rel (0) target = $region21
    $region20: #{tpu_custom_call.1} parent=1 // pred_region
      _
    $region21: #{tpu_custom_call.1} parent=1 // pred_fallthru
      _
    %v24 = vld [vmem:[%s0] sm:$0x1]
    %v25 = vld [vmem:[%s1] sm:$0xff]
    %v26 = vld [vmem:[%s1 + $0x8] sm:$0xff]
    %v27 = vld [vmem:[%s1 + $0x10] sm:$0xff]
    %v28 = vld [vmem:[%s1 + $0x18] sm:$0xff]
    %v29 = vld [vmem:[%s1 + $0x20] sm:$0xff]
    %v30 = vld [vmem:[%s1 + $0x28] sm:$0xff]
    %v31 = vld [vmem:[%s1 + $0x30] sm:$0xff]
    %v32 = vld [vmem:[%s1 + $0x38] sm:$0xff]
    %v33 = vld [vmem:[%s1 + $0x40] sm:$0xff]
    %v34 = vld [vmem:[%s1 + $0x48] sm:$0xff]
    %v35 = vld [vmem:[%s1 + $0x50] sm:$0xff]
    %v36 = vld [vmem:[%s1 + $0x58] sm:$0xff]
    %v37 = vld [vmem:[%s1 + $0x60] sm:$0xff]
    %v38 = vld [vmem:[%s1 + $0x68] sm:$0xff]
    %v39 = vld [vmem:[%s1 + $0x70] sm:$0xff]
    %v40 = vld [vmem:[%s1 + $0x78] sm:$0xff]
    %v41 = vld [vmem:[%s2] sm:$0x1]
    %42 = vmatprep.subr.mxu0 0.0
    %43 = vmatpush1.msra.mxu0 %v25
    %44 = vmatprep.subr.mxu0 0.0
    %45 = vmatpush1.msra.mxu0 %v26
    %46 = vmatprep.subr.mxu0 0.0
    %47 = vmatpush1.msra.mxu0 %v27
    %48 = vmatprep.subr.mxu0 0.0
    %49 = vmatpush1.msra.mxu0 %v28
    %50 = vmatprep.subr.mxu0 0.0
    %51 = vmatpush1.msra.mxu0 %v29
    %52 = vmatprep.subr.mxu0 0.0
    %53 = vmatpush1.msra.mxu0 %v30
    %54 = vmatprep.subr.mxu0 0.0
    %55 = vmatpush1.msra.mxu0 %v31
    %56 = vmatprep.subr.mxu0 0.0
    %57 = vmatpush1.msra.mxu0 %v32
    %58 = vmatprep.subr.mxu0 0.0
    %59 = vmatpush1.msra.mxu0 %v33
    %60 = vmatprep.subr.mxu0 0.0
    %61 = vmatpush1.msra.mxu0 %v34
    %62 = vmatprep.subr.mxu0 0.0
    %63 = vmatpush1.msra.mxu0 %v35
    %64 = vmatprep.subr.mxu0 0.0
    %65 = vmatpush1.msra.mxu0 %v36
    %66 = vmatprep.subr.mxu0 0.0
    %67 = vmatpush1.msra.mxu0 %v37
    %68 = vmatprep.subr.mxu0 0.0
    %69 = vmatpush1.msra.mxu0 %v38
    %70 = vmatprep.subr.mxu0 0.0
    %71 = vmatpush1.msra.mxu0 %v39
    %72 = vmatprep.subr.mxu0 0.0
    %73 = vmatpush1.msra.mxu0 %v40
    %74 = vmatprep.subr.mxu0 0.0
    %75 = vmatpush1.msra.mxu0 0.0
    %76 = vmatprep.subr.mxu0 0.0
    %77 = vmatpush1.msra.mxu0 0.0
    %78 = vmatprep.subr.mxu0 0.0
    %79 = vmatpush1.msra.mxu0 0.0
    %80 = vmatprep.subr.mxu0 0.0
    %81 = vmatpush1.msra.mxu0 0.0
    %82 = vmatprep.subr.mxu0 0.0
    %83 = vmatpush1.msra.mxu0 0.0
    %84 = vmatprep.subr.mxu0 0.0
    %85 = vmatpush1.msra.mxu0 0.0
    %86 = vmatprep.subr.mxu0 0.0
    %87 = vmatpush1.msra.mxu0 0.0
    %88 = vmatprep.subr.mxu0 0.0
    %89 = vmatpush1.msra.mxu0 0.0
    %90 = vmatprep.subr.mxu0 0.0
    %91 = vmatpush1.msra.mxu0 0.0
    %92 = vmatprep.subr.mxu0 0.0
    %93 = vmatpush1.msra.mxu0 0.0
    %94 = vmatprep.subr.mxu0 0.0
    %95 = vmatpush1.msra.mxu0 0.0
    %96 = vmatprep.subr.mxu0 0.0
    %97 = vmatpush1.msra.mxu0 0.0
    %98 = vmatprep.subr.mxu0 0.0
    %99 = vmatpush1.msra.mxu0 0.0
    %100 = vmatprep.subr.mxu0 0.0
    %101 = vmatpush1.msra.mxu0 0.0
    %102 = vmatprep.subr.mxu0 0.0
    %103 = vmatpush1.msra.mxu0 0.0
    %104 = vmatprep.subr.mxu0 0.0
    %105 = vmatpush1.msra.mxu0 0.0
    %106 = vmatprep.mubr.f32.mxu0 0.0
    %107 = vmatmul.mubr.f32.gmra.mrb[0].mxu0 %v24
    %v108 = vpop.f32.mrb[0].mxu0
    %v109 = vadd.f32 %v41, %v108
    %v110 = vpop.f32.mrb[0].mxu0
    %111 = vdwg.mxu0
    %v112 = vxor.u32 %v109, 2147483648
    %v113 = vmul.f32 %v112, 1.442695
    %v114 = vpow.pop %v113
    %v115 = vadd.f32 %v114, 1.0
    %v116 = vrcp.pop %v115
    %v117 = vmul.f32 1.0, %v116
    %vm118 = vcmask 385024
    %119 = vst.msk [vmem:[#allocation2] sm:$0x1] %vm118, %v117
    %v120 = vld [vmem:[%s3] sm:$0xff]
    %v121 = vld [vmem:[%s3 + $0x8] sm:$0xff]
    %v122 = vld [vmem:[%s3 + $0x10] sm:$0xff]
    %v123 = vld [vmem:[%s3 + $0x18] sm:$0xff]
    %v124 = vld [vmem:[%s3 + $0x20] sm:$0xff]
    %v125 = vld [vmem:[%s3 + $0x28] sm:$0xff]
    %v126 = vld [vmem:[%s4] sm:$0x1]
    %vm127 = vcmask 392192
    %v129 = vsel %vm127, %v117, 0
    %131 = vmatprep.subr.mxu0 0.0
    %132 = vmatpush1.msra.mxu0 %v120
    %133 = vmatprep.subr.mxu0 0.0
    %134 = vmatpush1.msra.mxu0 %v121
    %135 = vmatprep.subr.mxu0 0.0
    %136 = vmatpush1.msra.mxu0 %v122
    %137 = vmatprep.subr.mxu0 0.0
    %138 = vmatpush1.msra.mxu0 %v123
    %139 = vmatprep.subr.mxu0 0.0
    %140 = vmatpush1.msra.mxu0 %v124
    %141 = vmatprep.subr.mxu0 0.0
    %142 = vmatpush1.msra.mxu0 %v125
    %143 = vmatprep.subr.mxu0 0.0
    %144 = vmatpush1.msra.mxu0 0.0
    %145 = vmatprep.subr.mxu0 0.0
    %146 = vmatpush1.msra.mxu0 0.0
    %147 = vmatprep.subr.mxu0 0.0
    %148 = vmatpush1.msra.mxu0 0.0
    %149 = vmatprep.subr.mxu0 0.0
    %150 = vmatpush1.msra.mxu0 0.0
    %151 = vmatprep.subr.mxu0 0.0
    %152 = vmatpush1.msra.mxu0 0.0
    %153 = vmatprep.subr.mxu0 0.0
    %154 = vmatpush1.msra.mxu0 0.0
    %155 = vmatprep.subr.mxu0 0.0
    %156 = vmatpush1.msra.mxu0 0.0
    %157 = vmatprep.subr.mxu0 0.0
    %158 = vmatpush1.msra.mxu0 0.0
    %159 = vmatprep.subr.mxu0 0.0
    %160 = vmatpush1.msra.mxu0 0.0
    %161 = vmatprep.subr.mxu0 0.0
    %162 = vmatpush1.msra.mxu0 0.0
    %163 = vmatprep.subr.mxu0 0.0
    %164 = vmatpush1.msra.mxu0 0.0
    %165 = vmatprep.subr.mxu0 0.0
    %166 = vmatpush1.msra.mxu0 0.0
    %167 = vmatprep.subr.mxu0 0.0
    %168 = vmatpush1.msra.mxu0 0.0
    %169 = vmatprep.subr.mxu0 0.0
    %170 = vmatpush1.msra.mxu0 0.0
    %171 = vmatprep.subr.mxu0 0.0
    %172 = vmatpush1.msra.mxu0 0.0
    %173 = vmatprep.subr.mxu0 0.0
    %174 = vmatpush1.msra.mxu0 0.0
    %175 = vmatprep.subr.mxu0 0.0
    %176 = vmatpush1.msra.mxu0 0.0
    %177 = vmatprep.subr.mxu0 0.0
    %178 = vmatpush1.msra.mxu0 0.0
    %179 = vmatprep.subr.mxu0 0.0
    %180 = vmatpush1.msra.mxu0 0.0
    %181 = vmatprep.subr.mxu0 0.0
    %182 = vmatpush1.msra.mxu0 0.0
    %183 = vmatprep.subr.mxu0 0.0
    %184 = vmatpush1.msra.mxu0 0.0
    %185 = vmatprep.subr.mxu0 0.0
    %186 = vmatpush1.msra.mxu0 0.0
    %187 = vmatprep.subr.mxu0 0.0
    %188 = vmatpush1.msra.mxu0 0.0
    %189 = vmatprep.subr.mxu0 0.0
    %190 = vmatpush1.msra.mxu0 0.0
    %191 = vmatprep.subr.mxu0 0.0
    %192 = vmatpush1.msra.mxu0 0.0
    %193 = vmatprep.subr.mxu0 0.0
    %194 = vmatpush1.msra.mxu0 0.0
    %195 = vmatprep.mubr.f32.mxu0 0.0
    %196 = vmatmul.mubr.f32.gmra.mrb[0].mxu0 %v129
    %v197 = vpop.f32.mrb[0].mxu0
    %v198 = vadd.f32 %v126, %v197
    %v199 = vpop.f32.mrb[0].mxu0
    %200 = vdwg.mxu0
    %201 = vst [vmem:[#allocation4] sm:$0x1] %v198
    // Predicated region
    $region22: #{tpu_custom_call.1} parent=1 // pred_check
      _
    $region23: #{tpu_custom_call.1} parent=1 // pred_check_branch
      %203 = sbr.rel (0) target = $region25
    $region24: #{tpu_custom_call.1} parent=1 // pred_region
      %s205 = ssub.s32 16, 16
      %206 = vsyncadd [#allocation3], %s205
      %s208 = sshll.u32 [#allocation2], 4
      %s209 = int_to_ptr.vmem [resolvable:$true] %s208
      %211 = dma.vmem_to_hbm [thread:$0]  %s209, 16, %s5, [#allocation3]
    $region25: #{tpu_custom_call.1} parent=1 // pred_fallthru
      _
    // Predicated region
    $region26: #{tpu_custom_call.1} parent=1 // pred_check
      _
    $region27: #{tpu_custom_call.1} parent=1 // pred_check_branch
      %213 = sbr.rel (0) target = $region29
    $region28: #{tpu_custom_call.1} parent=1 // pred_region
      %s215 = ssub.s32 16, 16
      %216 = vsyncadd [#allocation5], %s215
      %s218 = sshll.u32 [#allocation4], 4
      %s219 = int_to_ptr.vmem [resolvable:$true] %s218
      %221 = dma.vmem_to_hbm [thread:$0]  %s219, 16, %s6, [#allocation5]
    $region29: #{tpu_custom_call.1} parent=1 // pred_fallthru
      _
    // Predicated region
    $region30: #{tpu_custom_call.1} parent=1 // pred_check
      _
    $region31: #{tpu_custom_call.1} parent=1 // pred_check_branch
      %223 = sbr.rel (0) target = $region33
    $region32: #{tpu_custom_call.1} parent=1 // pred_region
      %224 = dma.done [#allocation3], 16
    $region33: #{tpu_custom_call.1} parent=1 // pred_fallthru
      _
    // Predicated region
    $region34: #{tpu_custom_call.1} parent=1 // pred_check
      _
    $region35: #{tpu_custom_call.1} parent=1 // pred_check_branch
      %226 = sbr.rel (0) target = $region37
    $region36: #{tpu_custom_call.1} parent=1 // pred_region
      %227 = dma.done [#allocation5], 16
    $region37: #{tpu_custom_call.1} parent=1 // pred_fallthru
      _
    %228 = vsyncpa [#allocation3], 1
    %229 = vsyncpa [#allocation5], 1

</llo_original>
